<compile_context>
chip_gen: v7x
topology: tpu7x:2x2x1
jax: 0.10.0
libtpu: 0.0.40
codegen_flags: <defaults>
</compile_context>

<pallas_src>
import jax
import jax.numpy as jnp
from jax.experimental import pallas as pl
from jax.experimental.pallas import tpu as pltpu


LANE = 128  # vreg lane width: pad all feature dims to a multiple of this.


def _round_up(n, m):
    return ((n + m - 1) // m) * m


def _prelu(x, slope):
    return jnp.where(x >= 0, x, slope * x)


def mlp_kernel(x_ref, w1_ref, b1_ref, w2_ref, b2_ref, w3_ref, b3_ref, o_ref):
    # fc1 + PReLU(0.1)   (bf16 MXU inputs, f32 accumulate)
    h1 = jnp.dot(x_ref[...], w1_ref[...], preferred_element_type=jnp.float32)
    h1 = _prelu(h1 + b1_ref[...], jnp.float32(0.1))
    # fc2 + PReLU(0.1)
    h2 = jnp.dot(h1.astype(jnp.bfloat16), w2_ref[...], preferred_element_type=jnp.float32)
    h2 = _prelu(h2 + b2_ref[...], jnp.float32(0.1))
    # fc3
    out = jnp.dot(h2.astype(jnp.bfloat16), w3_ref[...], preferred_element_type=jnp.float32)
    out = out + b3_ref[...]
    o_ref[...] = out.astype(o_ref.dtype)


def mlp_forward(x, w1, b1, w2, b2, w3, b3, *, tm=128):
    """x: (B, F) f32; weights (in, out) f32; biases (1, out) f32. Returns (B, n_labels) f32."""
    B, F = x.shape
    H1, H2, L = w1.shape[1], w2.shape[1], w3.shape[1]

    # Pad every feature dim to a lane-dense multiple of 128, and batch to a multiple of TM.
    Fp, H1p, H2p, Lp = (_round_up(d, LANE) for d in (F, H1, H2, L))
    Bp = _round_up(B, tm)

    # Zero padding keeps the extra lanes exactly zero through the whole network
    # (pad(w)=0, pad(b)=0 -> prelu(0)=0 -> contributes 0 downstream).
    xd = jnp.pad(x, ((0, Bp - B), (0, Fp - F))).astype(jnp.bfloat16)
    w1p = jnp.pad(w1, ((0, Fp - F), (0, H1p - H1))).astype(jnp.bfloat16)
    b1p = jnp.pad(b1, ((0, 0), (0, H1p - H1))).astype(jnp.float32)
    w2p = jnp.pad(w2, ((0, H1p - H1), (0, H2p - H2))).astype(jnp.bfloat16)
    b2p = jnp.pad(b2, ((0, 0), (0, H2p - H2))).astype(jnp.float32)
    w3p = jnp.pad(w3, ((0, H2p - H2), (0, Lp - L))).astype(jnp.bfloat16)
    b3p = jnp.pad(b3, ((0, 0), (0, Lp - L))).astype(jnp.float32)

    grid = (Bp // tm,)
    # Activation / output tiles march over the batch axis; weights & biases stay resident.
    x_spec = pl.BlockSpec((tm, Fp), lambda i: (i, 0))
    o_spec = pl.BlockSpec((tm, Lp), lambda i: (i, 0))
    resident = lambda a: pl.BlockSpec(a.shape, lambda i: (0, 0))

    out_padded = pl.pallas_call(
        mlp_kernel,
        out_shape=jax.ShapeDtypeStruct((Bp, Lp), jnp.float32),
        grid=grid,
        in_specs=[x_spec, resident(w1p), resident(b1p), resident(w2p),
                  resident(b2p), resident(w3p), resident(b3p)],
        out_specs=o_spec,
        compiler_params=pltpu.CompilerParams(dimension_semantics=("parallel",)),
    )(xd, w1p, b1p, w2p, b2p, w3p, b3p)

    return out_padded[:B, :L]


def init_params(key, n_features, n_hidden_layers, n_labels):
    # Deterministic init mimicking nn.Linear's uniform(-1/sqrt(fan_in), 1/sqrt(fan_in)).
    ks = jax.random.split(key, 6)

    def linear(kw, kb, fan_in, fan_out):
        bound = 1.0 / jnp.sqrt(jnp.float32(fan_in))
        w = jax.random.uniform(kw, (fan_in, fan_out), jnp.float32, -bound, bound)
        b = jax.random.uniform(kb, (1, fan_out), jnp.float32, -bound, bound)
        return w, b

    w1, b1 = linear(ks[0], ks[1], n_features, n_hidden_layers[0])
    w2, b2 = linear(ks[2], ks[3], n_hidden_layers[0], n_hidden_layers[1])
    w3, b3 = linear(ks[4], ks[5], n_hidden_layers[1], n_labels)
    return w1, b1, w2, b2, w3, b3


def ref_forward(x, w1, b1, w2, b2, w3, b3):
    # Plain-JAX reference mirroring the kernel's bf16-input / f32-accumulate matmul path.
    bf = jnp.bfloat16
    h1 = jnp.dot(x.astype(bf), w1.astype(bf), preferred_element_type=jnp.float32) + b1
    h1 = jnp.where(h1 >= 0, h1, 0.1 * h1)
    h2 = jnp.dot(h1.astype(bf), w2.astype(bf), preferred_element_type=jnp.float32) + b2
    h2 = jnp.where(h2 >= 0, h2, 0.1 * h2)
    return jnp.dot(h2.astype(bf), w3.astype(bf), preferred_element_type=jnp.float32) + b3


if __name__ == "__main__":
    key = jax.random.PRNGKey(0)
    kx, kp = jax.random.split(key)

    batch = 8
    n_features = 32
    n_hidden_layers = (64, 32)
    n_labels = 16

    x = jax.random.normal(kx, (batch, n_features), jnp.float32)
    params = init_params(kp, n_features, n_hidden_layers, n_labels)

    out = mlp_forward(x, *params)
    jax.block_until_ready(out)

    ref = ref_forward(x, *params)
    assert out.shape == (batch, n_labels)
    assert jnp.allclose(out, ref, atol=2e-3, rtol=2e-3), float(jnp.max(jnp.abs(out - ref)))

    print("KERNEL_OK")
</pallas_src>

<mosaic_0001>
module attributes {stable_mosaic.version = 11 : i64} {
  func.func @mlp_kernel(%arg0: i32, %arg1: memref<128x128xbf16, #tpu.memory_space<vmem>>, %arg2: memref<128x128xbf16, #tpu.memory_space<vmem>>, %arg3: memref<1x128xf32, #tpu.memory_space<vmem>>, %arg4: memref<128x128xbf16, #tpu.memory_space<vmem>>, %arg5: memref<1x128xf32, #tpu.memory_space<vmem>>, %arg6: memref<128x128xbf16, #tpu.memory_space<vmem>>, %arg7: memref<1x128xf32, #tpu.memory_space<vmem>>, %arg8: memref<128x128xf32, #tpu.memory_space<vmem>>) attributes {dimension_semantics = [#tpu.dimension_semantics<parallel>], iteration_bounds = array<i64: 1>, scalar_prefetch = 0 : i64, scratch_operands = 0 : i64, tpu.core_type = #tpu.core_type<tc>, window_params = [{transform_indices = @transform_0, window_bounds = array<i64: 128, 128>}, {pipeline_mode = #tpu.pipeline_mode<synchronous>, transform_indices = @transform_1, window_bounds = array<i64: 128, 128>}, {pipeline_mode = #tpu.pipeline_mode<synchronous>, transform_indices = @transform_2, window_bounds = array<i64: 1, 128>}, {pipeline_mode = #tpu.pipeline_mode<synchronous>, transform_indices = @transform_3, window_bounds = array<i64: 128, 128>}, {pipeline_mode = #tpu.pipeline_mode<synchronous>, transform_indices = @transform_4, window_bounds = array<i64: 1, 128>}, {pipeline_mode = #tpu.pipeline_mode<synchronous>, transform_indices = @transform_5, window_bounds = array<i64: 128, 128>}, {pipeline_mode = #tpu.pipeline_mode<synchronous>, transform_indices = @transform_6, window_bounds = array<i64: 1, 128>}, {transform_indices = @transform_7, window_bounds = array<i64: 128, 128>}]} {
    %c0 = arith.constant 0 : index
    %c0_0 = arith.constant 0 : index
    %0 = vector.load %arg1[%c0, %c0_0] : memref<128x128xbf16, #tpu.memory_space<vmem>>, vector<128x128xbf16>
    %c0_1 = arith.constant 0 : index
    %c0_2 = arith.constant 0 : index
    %1 = vector.load %arg2[%c0_1, %c0_2] : memref<128x128xbf16, #tpu.memory_space<vmem>>, vector<128x128xbf16>
    %cst = arith.constant dense<0.000000e+00> : vector<128x128xf32>
    %2 = tpu.matmul %0, %1, %cst {dimension_numbers = #tpu.dot_dimension_numbers<[1], [0], [0], [1], [0, 0, 1, 1], [], []>} : vector<128x128xbf16>, vector<128x128xbf16>, vector<128x128xf32> -> vector<128x128xf32>
    %c0_3 = arith.constant 0 : index
    %c0_4 = arith.constant 0 : index
    %3 = vector.load %arg3[%c0_3, %c0_4] : memref<1x128xf32, #tpu.memory_space<vmem>>, vector<1x128xf32>
    %4 = vector.broadcast %3 : vector<1x128xf32> to vector<128x128xf32>
    %5 = arith.addf %2, %4 : vector<128x128xf32>
    %cst_5 = arith.constant 0.000000e+00 : f32
    %6 = vector.broadcast %cst_5 : f32 to vector<128x128xf32>
    %7 = arith.cmpf oge, %5, %6 : vector<128x128xf32>
    %cst_6 = arith.constant 1.000000e-01 : f32
    %8 = vector.broadcast %cst_6 : f32 to vector<128x128xf32>
    %9 = arith.mulf %8, %5 : vector<128x128xf32>
    %10 = arith.select %7, %5, %9 : vector<128x128xi1>, vector<128x128xf32>
    %11 = arith.truncf %10 : vector<128x128xf32> to vector<128x128xbf16>
    %c0_7 = arith.constant 0 : index
    %c0_8 = arith.constant 0 : index
    %12 = vector.load %arg4[%c0_7, %c0_8] : memref<128x128xbf16, #tpu.memory_space<vmem>>, vector<128x128xbf16>
    %cst_9 = arith.constant dense<0.000000e+00> : vector<128x128xf32>
    %13 = tpu.matmul %11, %12, %cst_9 {dimension_numbers = #tpu.dot_dimension_numbers<[1], [0], [0], [1], [0, 0, 1, 1], [], []>} : vector<128x128xbf16>, vector<128x128xbf16>, vector<128x128xf32> -> vector<128x128xf32>
    %c0_10 = arith.constant 0 : index
    %c0_11 = arith.constant 0 : index
    %14 = vector.load %arg5[%c0_10, %c0_11] : memref<1x128xf32, #tpu.memory_space<vmem>>, vector<1x128xf32>
    %15 = vector.broadcast %14 : vector<1x128xf32> to vector<128x128xf32>
    %16 = arith.addf %13, %15 : vector<128x128xf32>
    %cst_12 = arith.constant 0.000000e+00 : f32
    %17 = vector.broadcast %cst_12 : f32 to vector<128x128xf32>
    %18 = arith.cmpf oge, %16, %17 : vector<128x128xf32>
    %cst_13 = arith.constant 1.000000e-01 : f32
    %19 = vector.broadcast %cst_13 : f32 to vector<128x128xf32>
    %20 = arith.mulf %19, %16 : vector<128x128xf32>
    %21 = arith.select %18, %16, %20 : vector<128x128xi1>, vector<128x128xf32>
    %22 = arith.truncf %21 : vector<128x128xf32> to vector<128x128xbf16>
    %c0_14 = arith.constant 0 : index
    %c0_15 = arith.constant 0 : index
    %23 = vector.load %arg6[%c0_14, %c0_15] : memref<128x128xbf16, #tpu.memory_space<vmem>>, vector<128x128xbf16>
    %cst_16 = arith.constant dense<0.000000e+00> : vector<128x128xf32>
    %24 = tpu.matmul %22, %23, %cst_16 {dimension_numbers = #tpu.dot_dimension_numbers<[1], [0], [0], [1], [0, 0, 1, 1], [], []>} : vector<128x128xbf16>, vector<128x128xbf16>, vector<128x128xf32> -> vector<128x128xf32>
    %c0_17 = arith.constant 0 : index
    %c0_18 = arith.constant 0 : index
    %25 = vector.load %arg7[%c0_17, %c0_18] : memref<1x128xf32, #tpu.memory_space<vmem>>, vector<1x128xf32>
    %26 = vector.broadcast %25 : vector<1x128xf32> to vector<128x128xf32>
    %27 = arith.addf %24, %26 : vector<128x128xf32>
    %c0_19 = arith.constant 0 : index
    %c0_20 = arith.constant 0 : index
    %28 = vector.load %arg8[%c0_19, %c0_20] : memref<128x128xf32, #tpu.memory_space<vmem>>, vector<128x128xf32>
    tpu.vector_store %arg8[%c0_19, %c0_20], %27 {strides = array<i32>} : memref<128x128xf32, #tpu.memory_space<vmem>>, vector<128x128xf32>,
    return
  }
  func.func @transform_0(%arg0: i32) -> (i32, i32) {
    %c0_i32 = arith.constant 0 : i32
    %c0_i32_0 = arith.constant 0 : i32
    return %arg0, %c0_i32 : i32, i32
  }
  func.func @transform_1(%arg0: i32) -> (i32, i32) {
    %c0_i32 = arith.constant 0 : i32
    %c0_i32_0 = arith.constant 0 : i32
    %c0_i32_1 = arith.constant 0 : i32
    return %c0_i32, %c0_i32_0 : i32, i32
  }
  func.func @transform_2(%arg0: i32) -> (i32, i32) {
    %c0_i32 = arith.constant 0 : i32
    %c0_i32_0 = arith.constant 0 : i32
    %c0_i32_1 = arith.constant 0 : i32
    return %c0_i32, %c0_i32_0 : i32, i32
  }
  func.func @transform_3(%arg0: i32) -> (i32, i32) {
    %c0_i32 = arith.constant 0 : i32
    %c0_i32_0 = arith.constant 0 : i32
    %c0_i32_1 = arith.constant 0 : i32
    return %c0_i32, %c0_i32_0 : i32, i32
  }
  func.func @transform_4(%arg0: i32) -> (i32, i32) {
    %c0_i32 = arith.constant 0 : i32
    %c0_i32_0 = arith.constant 0 : i32
    %c0_i32_1 = arith.constant 0 : i32
    return %c0_i32, %c0_i32_0 : i32, i32
  }
  func.func @transform_5(%arg0: i32) -> (i32, i32) {
    %c0_i32 = arith.constant 0 : i32
    %c0_i32_0 = arith.constant 0 : i32
    %c0_i32_1 = arith.constant 0 : i32
    return %c0_i32, %c0_i32_0 : i32, i32
  }
  func.func @transform_6(%arg0: i32) -> (i32, i32) {
    %c0_i32 = arith.constant 0 : i32
    %c0_i32_0 = arith.constant 0 : i32
    %c0_i32_1 = arith.constant 0 : i32
    return %c0_i32, %c0_i32_0 : i32, i32
  }
  func.func @transform_7(%arg0: i32) -> (i32, i32) {
    %c0_i32 = arith.constant 0 : i32
    %c0_i32_0 = arith.constant 0 : i32
    return %arg0, %c0_i32 : i32, i32
  }
}

</mosaic_0001>

<llo_original>
// kernel: tpu_custom_call.1
$region0: #{tpu_custom_call.1}
  #allocation0 [shape = 'u32[]', space=smem, size = 0x4, offset = 0x4, fixed_abs, tag = 'smem constant byte address 0x4 - core index']
  #allocation1 [shape = 'u32[144,128]{1,0:T(1,128)}', space=vmem, size = 0x12000, scoped, tag = 'internal scratch']
  %s0 = inlined_call_operand.hbm [shape: bf16[128,128], index: 0, kind: input, shape index: {}]
  %s1 = inlined_call_operand.hbm [shape: bf16[128,128], index: 1, kind: input, shape index: {}]
  %s2 = inlined_call_operand.vmem [shape: f32[1,128], index: 2, kind: input, shape index: {}]
  %s3 = inlined_call_operand.hbm [shape: bf16[128,128], index: 3, kind: input, shape index: {}]
  %s4 = inlined_call_operand.vmem [shape: f32[1,128], index: 4, kind: input, shape index: {}]
  %s5 = inlined_call_operand.hbm [shape: bf16[128,128], index: 5, kind: input, shape index: {}]
  %s6 = inlined_call_operand.vmem [shape: f32[1,128], index: 6, kind: input, shape index: {}]
  %s7 = inlined_call_operand.hbm [shape: f32[128,128], index: 7, kind: output, shape index: {}]
  %s8 = sld [smem:[#allocation0]]
  $region54: #{tpu_custom_call.1} parent=0
    _
  %s10 = ssub.s32 1, %s8
  %s11 = scalar_select 0, %s10, %s8
  $region1: #{tpu_custom_call.1} parent=0
    #allocation2 [shape = 'u8[32768]{0}', space=vmem, size = 0x8000, scoped, tag = 'input window, operand 0, single buffered']
    #allocation3 [shape = 's32[1]{0}', space=sflag, size = 0x4, scoped, tag = 'scoped memory for tpu_custom_call.1']
    #allocation4 [shape = 's32[1]{0}', space=sflag, size = 0x4, scoped, tag = 'scoped memory for tpu_custom_call.1']
    #allocation5 [shape = 'u8[32768]{0}', space=vmem, size = 0x8000, scoped, tag = 'input window, operand 1, single buffered']
    #allocation6 [shape = 's32[1]{0}', space=sflag, size = 0x4, scoped, tag = 'scoped memory for tpu_custom_call.1']
    #allocation7 [shape = 'u8[32768]{0}', space=vmem, size = 0x8000, scoped, tag = 'input window, operand 3, single buffered']
    #allocation8 [shape = 'u8[32768]{0}', space=vmem, size = 0x8000, scoped, tag = 'input window, operand 5, single buffered']
    #allocation9 [shape = 's32[1]{0}', space=sflag, size = 0x4, scoped, tag = 'scoped memory for tpu_custom_call.1']
    #allocation10 [shape = 'u8[65536]{0}', space=vmem, size = 0x10000, scoped, tag = 'output window, operand 0, single buffered']
    %12 = vsyncpa [#allocation3], 0
    %13 = vsyncpa [#allocation6], 0
    %14 = vsyncpa [#allocation9], 0
    %15 = vsyncpa [#allocation4], 0
    // Predicated region
    $region2: #{tpu_custom_call.1} parent=1 // pred_check
      _
    $region3: #{tpu_custom_call.1} parent=1 // pred_check_branch
      %17 = sbr.rel (0) target = $region5
    $region4: #{tpu_custom_call.1} parent=1 // pred_region
      %s19 = ssub.s32 1024, 1024
      %20 = vsyncadd [#allocation3], %s19
      %s21 = sshll.u32 [#allocation2], 4
      %s22 = int_to_ptr.vmem [resolvable:$true] %s21
      %27 = dma.hbm_to_vmem [thread:$0]  %s0, 1024, %s22, [#allocation3], 64, 64, 4
    $region5: #{tpu_custom_call.1} parent=1 // pred_fallthru
      _
    // Predicated region
    $region6: #{tpu_custom_call.1} parent=1 // pred_check
      _
    $region7: #{tpu_custom_call.1} parent=1 // pred_check_branch
      %29 = sbr.rel (0) target = $region9
    $region8: #{tpu_custom_call.1} parent=1 // pred_region
      %s31 = ssub.s32 1024, 1024
      %32 = vsyncadd [#allocation6], %s31
      %s33 = sshll.u32 [#allocation5], 4
      %s34 = int_to_ptr.vmem [resolvable:$true] %s33
      %39 = dma.hbm_to_vmem [thread:$0]  %s1, 1024, %s34, [#allocation6], 64, 64, 4
    $region9: #{tpu_custom_call.1} parent=1 // pred_fallthru
      _
    // Predicated region
    $region10: #{tpu_custom_call.1} parent=1 // pred_check
      _
    $region11: #{tpu_custom_call.1} parent=1 // pred_check_branch
      %41 = sbr.rel (0) target = $region13
    $region12: #{tpu_custom_call.1} parent=1 // pred_region
      _
    $region13: #{tpu_custom_call.1} parent=1 // pred_fallthru
      _
    // Predicated region
    $region14: #{tpu_custom_call.1} parent=1 // pred_check
      _
    $region15: #{tpu_custom_call.1} parent=1 // pred_check_branch
      %43 = sbr.rel (0) target = $region17
    $region16: #{tpu_custom_call.1} parent=1 // pred_region
      %s45 = ssub.s32 1024, 1024
      %46 = vsyncadd [#allocation6], %s45
      %s47 = sshll.u32 [#allocation7], 4
      %s48 = int_to_ptr.vmem [resolvable:$true] %s47
      %53 = dma.hbm_to_vmem [thread:$0]  %s3, 1024, %s48, [#allocation6], 64, 64, 4
    $region17: #{tpu_custom_call.1} parent=1 // pred_fallthru
      _
    // Predicated region
    $region18: #{tpu_custom_call.1} parent=1 // pred_check
      _
    $region19: #{tpu_custom_call.1} parent=1 // pred_check_branch
      %55 = sbr.rel (0) target = $region21
    $region20: #{tpu_custom_call.1} parent=1 // pred_region
      _
    $region21: #{tpu_custom_call.1} parent=1 // pred_fallthru
      _
    // Predicated region
    $region22: #{tpu_custom_call.1} parent=1 // pred_check
      _
    $region23: #{tpu_custom_call.1} parent=1 // pred_check_branch
      %57 = sbr.rel (0) target = $region25
    $region24: #{tpu_custom_call.1} parent=1 // pred_region
      %s59 = ssub.s32 1024, 1024
      %60 = vsyncadd [#allocation9], %s59
      %s61 = sshll.u32 [#allocation8], 4
      %s62 = int_to_ptr.vmem [resolvable:$true] %s61
      %67 = dma.hbm_to_vmem [thread:$0]  %s5, 1024, %s62, [#allocation9], 64, 64, 4
    $region25: #{tpu_custom_call.1} parent=1 // pred_fallthru
      _
    // Predicated region
    $region26: #{tpu_custom_call.1} parent=1 // pred_check
      _
    $region27: #{tpu_custom_call.1} parent=1 // pred_check_branch
      %69 = sbr.rel (0) target = $region29
    $region28: #{tpu_custom_call.1} parent=1 // pred_region
      _
    $region29: #{tpu_custom_call.1} parent=1 // pred_fallthru
      _
    // Predicated region
    $region30: #{tpu_custom_call.1} parent=1 // pred_check
      _
    $region31: #{tpu_custom_call.1} parent=1 // pred_check_branch
      %71 = sbr.rel (0) target = $region33
    $region32: #{tpu_custom_call.1} parent=1 // pred_region
      %72 = dma.done [#allocation3], 1024
    $region33: #{tpu_custom_call.1} parent=1 // pred_fallthru
      _
    // Predicated region
    $region34: #{tpu_custom_call.1} parent=1 // pred_check
      _
    $region35: #{tpu_custom_call.1} parent=1 // pred_check_branch
      %74 = sbr.rel (0) target = $region37
    $region36: #{tpu_custom_call.1} parent=1 // pred_region
      %75 = dma.done [#allocation6], 1024
    $region37: #{tpu_custom_call.1} parent=1 // pred_fallthru
      _
    // Predicated region
    $region38: #{tpu_custom_call.1} parent=1 // pred_check
      _
    $region39: #{tpu_custom_call.1} parent=1 // pred_check_branch
      %77 = sbr.rel (0) target = $region41
    $region40: #{tpu_custom_call.1} parent=1 // pred_region
      %78 = dma.done [#allocation6], 1024
    $region41: #{tpu_custom_call.1} parent=1 // pred_fallthru
      _
    // Predicated region
    $region42: #{tpu_custom_call.1} parent=1 // pred_check
      _
    $region43: #{tpu_custom_call.1} parent=1 // pred_check_branch
      %80 = sbr.rel (0) target = $region45
    $region44: #{tpu_custom_call.1} parent=1 // pred_region
      %81 = dma.done [#allocation9], 1024
    $region45: #{tpu_custom_call.1} parent=1 // pred_fallthru
      _
    %v83 = vld [vmem:[#allocation2] sm:$0xf]
    %v84 = vld [vmem:[#allocation2 + $0x4] sm:$0xf]
    %v85 = vld [vmem:[#allocation2 + $0x8] sm:$0xf]
    %v86 = vld [vmem:[#allocation2 + $0xc] sm:$0xf]
    %v87 = vld [vmem:[#allocation2 + $0x10] sm:$0xf]
    %v88 = vld [vmem:[#allocation2 + $0x14] sm:$0xf]
    %v89 = vld [vmem:[#allocation2 + $0x18] sm:$0xf]
    %v90 = vld [vmem:[#allocation2 + $0x1c] sm:$0xf]
    %v91 = vld [vmem:[#allocation2 + $0x20] sm:$0xf]
    %v92 = vld [vmem:[#allocation2 + $0x24] sm:$0xf]
    %v93 = vld [vmem:[#allocation2 + $0x28] sm:$0xf]
    %v94 = vld [vmem:[#allocation2 + $0x2c] sm:$0xf]
    %v95 = vld [vmem:[#allocation2 + $0x30] sm:$0xf]
    %v96 = vld [vmem:[#allocation2 + $0x34] sm:$0xf]
    %v97 = vld [vmem:[#allocation2 + $0x38] sm:$0xf]
    %v98 = vld [vmem:[#allocation2 + $0x3c] sm:$0xf]
    %v99 = vld [vmem:[#allocation5] sm:$0xf]
    %v100 = vld [vmem:[#allocation5 + $0x4] sm:$0xf]
    %v101 = vld [vmem:[#allocation5 + $0x8] sm:$0xf]
    %v102 = vld [vmem:[#allocation5 + $0xc] sm:$0xf]
    %v103 = vld [vmem:[#allocation5 + $0x10] sm:$0xf]
    %v104 = vld [vmem:[#allocation5 + $0x14] sm:$0xf]
    %v105 = vld [vmem:[#allocation5 + $0x18] sm:$0xf]
    %v106 = vld [vmem:[#allocation5 + $0x1c] sm:$0xf]
    %v107 = vld [vmem:[#allocation5 + $0x20] sm:$0xf]
    %v108 = vld [vmem:[#allocation5 + $0x24] sm:$0xf]
    %v109 = vld [vmem:[#allocation5 + $0x28] sm:$0xf]
    %v110 = vld [vmem:[#allocation5 + $0x2c] sm:$0xf]
    %v111 = vld [vmem:[#allocation5 + $0x30] sm:$0xf]
    %v112 = vld [vmem:[#allocation5 + $0x34] sm:$0xf]
    %v113 = vld [vmem:[#allocation5 + $0x38] sm:$0xf]
    %v114 = vld [vmem:[#allocation5 + $0x3c] sm:$0xf]
    %v115 = vld [vmem:[%s2] sm:$0x1]
    %v117 = vlaneseq
    %v118 = vshrl.u32 %v117, 7
    %v119 = vsub.s32 0, %v118
    %v120 = vrot.slane %v115, %v119
    %v138 = vunpack.c.l.b16 %v83
    %v139 = vunpack.c.l.b16 %v84
    %v140 = vunpack.c.l.b16 %v85
    %v141 = vunpack.c.l.b16 %v86
    %v142 = vunpack.c.l.b16 %v87
    %v143 = vunpack.c.l.b16 %v88
    %v144 = vunpack.c.l.b16 %v89
    %v145 = vunpack.c.l.b16 %v90
    %v146 = vunpack.c.l.b16 %v91
    %v147 = vunpack.c.l.b16 %v92
    %v148 = vunpack.c.l.b16 %v93
    %v149 = vunpack.c.l.b16 %v94
    %v150 = vunpack.c.l.b16 %v95
    %v151 = vunpack.c.l.b16 %v96
    %v152 = vunpack.c.l.b16 %v97
    %v153 = vunpack.c.l.b16 %v98
    %v154 = vpack.c.b16 %v139, %v138
    %v155 = vpack.c.b16 %v141, %v140
    %v156 = vpack.c.b16 %v143, %v142
    %v157 = vpack.c.b16 %v145, %v144
    %v158 = vpack.c.b16 %v147, %v146
    %v159 = vpack.c.b16 %v149, %v148
    %v160 = vpack.c.b16 %v151, %v150
    %v161 = vpack.c.b16 %v153, %v152
    %v186 = vunpack.c.l.b16 %v99
    %v187 = vunpack.c.l.b16 %v100
    %v188 = vunpack.c.l.b16 %v101
    %v189 = vunpack.c.l.b16 %v102
    %v190 = vunpack.c.l.b16 %v103
    %v191 = vunpack.c.l.b16 %v104
    %v192 = vunpack.c.l.b16 %v105
    %v193 = vunpack.c.l.b16 %v106
    %v194 = vunpack.c.l.b16 %v107
    %v195 = vunpack.c.l.b16 %v108
    %v196 = vunpack.c.l.b16 %v109
    %v197 = vunpack.c.l.b16 %v110
    %v198 = vunpack.c.l.b16 %v111
    %v199 = vunpack.c.l.b16 %v112
    %v200 = vunpack.c.l.b16 %v113
    %v201 = vunpack.c.l.b16 %v114
    %v202 = vpack.c.b16 %v187, %v186
    %v203 = vpack.c.b16 %v189, %v188
    %v204 = vpack.c.b16 %v191, %v190
    %v205 = vpack.c.b16 %v193, %v192
    %v206 = vpack.c.b16 %v195, %v194
    %v207 = vpack.c.b16 %v197, %v196
    %v208 = vpack.c.b16 %v199, %v198
    %v209 = vpack.c.b16 %v201, %v200
    %218 = vmatprep.subr.bf16.mxu0 0
    %219 = vmatpush1.bf16.msra.mxu0 %v202
    %220 = vmatprep.subr.bf16.mxu0 0
    %221 = vmatpush1.bf16.msra.mxu0 %v203
    %222 = vmatprep.subr.bf16.mxu0 0
    %223 = vmatpush1.bf16.msra.mxu0 %v204
    %224 = vmatprep.subr.bf16.mxu0 0
    %225 = vmatpush1.bf16.msra.mxu0 %v205
    %226 = vmatprep.subr.bf16.mxu0 0
    %227 = vmatpush1.bf16.msra.mxu0 %v206
    %228 = vmatprep.subr.bf16.mxu0 0
    %229 = vmatpush1.bf16.msra.mxu0 %v207
    %230 = vmatprep.subr.bf16.mxu0 0
    %231 = vmatpush1.bf16.msra.mxu0 %v208
    %232 = vmatprep.subr.bf16.mxu0 0
    %233 = vmatpush1.bf16.msra.mxu0 %v209
    %234 = vmatprep.subr.bf16.mxu0 0
    %235 = vmatpush1.bf16.msra.mxu0 0
    %236 = vmatprep.subr.bf16.mxu0 0
    %237 = vmatpush1.bf16.msra.mxu0 0
    %238 = vmatprep.subr.bf16.mxu0 0
    %239 = vmatpush1.bf16.msra.mxu0 0
    %240 = vmatprep.subr.bf16.mxu0 0
    %241 = vmatpush1.bf16.msra.mxu0 0
    %242 = vmatprep.subr.bf16.mxu0 0
    %243 = vmatpush1.bf16.msra.mxu0 0
    %244 = vmatprep.subr.bf16.mxu0 0
    %245 = vmatpush1.bf16.msra.mxu0 0
    %246 = vmatprep.subr.bf16.mxu0 0
    %247 = vmatpush1.bf16.msra.mxu0 0
    %248 = vmatprep.subr.bf16.mxu0 0
    %249 = vmatpush1.bf16.msra.mxu0 0
    %250 = vmatprep.mubr.bf16.mxu0 0
    %251 = vmatmul.mubr.bf16.gmra.mrb[0].mxu0 %v154
    %v252 = vpop.f32.mrb[0].mxu0
    %v253 = vadd.f32 %v120, %v252
    %v254 = vpop.f32.mrb[0].mxu0
    %v255 = vpop.f32.mrb[0].mxu0
    %v256 = vadd.f32 %v120, %v255
    %v257 = vpop.f32.mrb[0].mxu0
    %258 = vmatprep.mubr.bf16.mxu0 0
    %259 = vmatmul.mubr.bf16.gmra.mrb[0].mxu0 %v155
    %v260 = vpop.f32.mrb[0].mxu0
    %v261 = vadd.f32 %v120, %v260
    %v262 = vpop.f32.mrb[0].mxu0
    %v263 = vpop.f32.mrb[0].mxu0
    %v264 = vadd.f32 %v120, %v263
    %v265 = vpop.f32.mrb[0].mxu0
    %266 = vmatprep.mubr.bf16.mxu0 0
    %267 = vmatmul.mubr.bf16.gmra.mrb[0].mxu0 %v156
    %v268 = vpop.f32.mrb[0].mxu0
    %v269 = vadd.f32 %v120, %v268
    %v270 = vpop.f32.mrb[0].mxu0
    %v271 = vpop.f32.mrb[0].mxu0
    %v272 = vadd.f32 %v120, %v271
    %v273 = vpop.f32.mrb[0].mxu0
    %274 = vmatprep.mubr.bf16.mxu0 0
    %275 = vmatmul.mubr.bf16.gmra.mrb[0].mxu0 %v157
    %v276 = vpop.f32.mrb[0].mxu0
    %v277 = vadd.f32 %v120, %v276
    %v278 = vpop.f32.mrb[0].mxu0
    %v279 = vpop.f32.mrb[0].mxu0
    %v280 = vadd.f32 %v120, %v279
    %v281 = vpop.f32.mrb[0].mxu0
    %282 = vmatprep.mubr.bf16.mxu0 0
    %283 = vmatmul.mubr.bf16.gmra.mrb[0].mxu0 %v158
    %v284 = vpop.f32.mrb[0].mxu0
    %v285 = vadd.f32 %v120, %v284
    %v286 = vpop.f32.mrb[0].mxu0
    %v287 = vpop.f32.mrb[0].mxu0
    %v288 = vadd.f32 %v120, %v287
    %v289 = vpop.f32.mrb[0].mxu0
    %290 = vmatprep.mubr.bf16.mxu0 0
    %291 = vmatmul.mubr.bf16.gmra.mrb[0].mxu0 %v159
    %v292 = vpop.f32.mrb[0].mxu0
    %v293 = vadd.f32 %v120, %v292
    %v294 = vpop.f32.mrb[0].mxu0
    %v295 = vpop.f32.mrb[0].mxu0
    %v296 = vadd.f32 %v120, %v295
    %v297 = vpop.f32.mrb[0].mxu0
    %298 = vmatprep.mubr.bf16.mxu0 0
    %299 = vmatmul.mubr.bf16.gmra.mrb[0].mxu0 %v160
    %v300 = vpop.f32.mrb[0].mxu0
    %v301 = vadd.f32 %v120, %v300
    %v302 = vpop.f32.mrb[0].mxu0
    %v303 = vpop.f32.mrb[0].mxu0
    %v304 = vadd.f32 %v120, %v303
    %v305 = vpop.f32.mrb[0].mxu0
    %306 = vmatprep.mubr.bf16.mxu0 0
    %307 = vmatmul.mubr.bf16.gmra.mrb[0].mxu0 %v161
    %v308 = vpop.f32.mrb[0].mxu0
    %v309 = vadd.f32 %v120, %v308
    %v310 = vpop.f32.mrb[0].mxu0
    %v311 = vpop.f32.mrb[0].mxu0
    %v312 = vadd.f32 %v120, %v311
    %v313 = vpop.f32.mrb[0].mxu0
    %314 = vdwg.mxu0
    %vm315 = vcmp.ge.f32.partialorder %v253, 0.0
    %vm316 = vcmp.ge.f32.partialorder %v256, 0.0
    %vm317 = vcmp.ge.f32.partialorder %v261, 0.0
    %vm318 = vcmp.ge.f32.partialorder %v264, 0.0
    %vm319 = vcmp.ge.f32.partialorder %v269, 0.0
    %vm320 = vcmp.ge.f32.partialorder %v272, 0.0
    %vm321 = vcmp.ge.f32.partialorder %v277, 0.0
    %vm322 = vcmp.ge.f32.partialorder %v280, 0.0
    %vm323 = vcmp.ge.f32.partialorder %v285, 0.0
    %vm324 = vcmp.ge.f32.partialorder %v288, 0.0
    %vm325 = vcmp.ge.f32.partialorder %v293, 0.0
    %vm326 = vcmp.ge.f32.partialorder %v296, 0.0
    %vm327 = vcmp.ge.f32.partialorder %v301, 0.0
    %vm328 = vcmp.ge.f32.partialorder %v304, 0.0
    %vm329 = vcmp.ge.f32.partialorder %v309, 0.0
    %vm330 = vcmp.ge.f32.partialorder %v312, 0.0
    %v331 = vmul.f32 %v253, 0.1
    %v332 = vmul.f32 %v256, 0.1
    %v333 = vmul.f32 %v261, 0.1
    %v334 = vmul.f32 %v264, 0.1
    %v335 = vmul.f32 %v269, 0.1
    %v336 = vmul.f32 %v272, 0.1
    %v337 = vmul.f32 %v277, 0.1
    %v338 = vmul.f32 %v280, 0.1
    %v339 = vmul.f32 %v285, 0.1
    %v340 = vmul.f32 %v288, 0.1
    %v341 = vmul.f32 %v293, 0.1
    %v342 = vmul.f32 %v296, 0.1
    %v343 = vmul.f32 %v301, 0.1
    %v344 = vmul.f32 %v304, 0.1
    %v345 = vmul.f32 %v309, 0.1
    %v346 = vmul.f32 %v312, 0.1
    %v347 = vsel %vm315, %v253, %v331
    %v348 = vsel %vm316, %v256, %v332
    %v349 = vsel %vm317, %v261, %v333
    %v350 = vsel %vm318, %v264, %v334
    %v351 = vsel %vm319, %v269, %v335
    %v352 = vsel %vm320, %v272, %v336
    %v353 = vsel %vm321, %v277, %v337
    %v354 = vsel %vm322, %v280, %v338
    %v355 = vsel %vm323, %v285, %v339
    %v356 = vsel %vm324, %v288, %v340
    %v357 = vsel %vm325, %v293, %v341
    %v358 = vsel %vm326, %v296, %v342
    %v359 = vsel %vm327, %v301, %v343
    %v360 = vsel %vm328, %v304, %v344
    %v361 = vsel %vm329, %v309, %v345
    %v362 = vsel %vm330, %v312, %v346
    %v363 = vpack.c.bf16 %v348, %v347
    %v364 = vpack.c.bf16 %v350, %v349
    %v365 = vpack.c.bf16 %v352, %v351
    %v366 = vpack.c.bf16 %v354, %v353
    %v367 = vpack.c.bf16 %v356, %v355
    %v368 = vpack.c.bf16 %v358, %v357
    %v369 = vpack.c.bf16 %v360, %v359
    %v370 = vpack.c.bf16 %v362, %v361
    %v371 = vld [vmem:[#allocation7] sm:$0xf]
    %v372 = vld [vmem:[#allocation7 + $0x4] sm:$0xf]
    %v373 = vld [vmem:[#allocation7 + $0x8] sm:$0xf]
    %v374 = vld [vmem:[#allocation7 + $0xc] sm:$0xf]
    %v375 = vld [vmem:[#allocation7 + $0x10] sm:$0xf]
    %v376 = vld [vmem:[#allocation7 + $0x14] sm:$0xf]
    %v377 = vld [vmem:[#allocation7 + $0x18] sm:$0xf]
    %v378 = vld [vmem:[#allocation7 + $0x1c] sm:$0xf]
    %v379 = vld [vmem:[#allocation7 + $0x20] sm:$0xf]
    %v380 = vld [vmem:[#allocation7 + $0x24] sm:$0xf]
    %v381 = vld [vmem:[#allocation7 + $0x28] sm:$0xf]
    %v382 = vld [vmem:[#allocation7 + $0x2c] sm:$0xf]
    %v383 = vld [vmem:[#allocation7 + $0x30] sm:$0xf]
    %v384 = vld [vmem:[#allocation7 + $0x34] sm:$0xf]
    %v385 = vld [vmem:[#allocation7 + $0x38] sm:$0xf]
    %v386 = vld [vmem:[#allocation7 + $0x3c] sm:$0xf]
    %v387 = vld [vmem:[%s4] sm:$0x1]
    %v389 = vlaneseq
    %v390 = vshrl.u32 %v389, 7
    %v391 = vsub.s32 0, %v390
    %v392 = vrot.slane %v387, %v391
    %v410 = vunpack.c.l.b16 %v371
    %v411 = vunpack.c.l.b16 %v372
    %v412 = vunpack.c.l.b16 %v373
    %v413 = vunpack.c.l.b16 %v374
    %v414 = vunpack.c.l.b16 %v375
    %v415 = vunpack.c.l.b16 %v376
    %v416 = vunpack.c.l.b16 %v377
    %v417 = vunpack.c.l.b16 %v378
    %v418 = vunpack.c.l.b16 %v379
    %v419 = vunpack.c.l.b16 %v380
    %v420 = vunpack.c.l.b16 %v381
    %v421 = vunpack.c.l.b16 %v382
    %v422 = vunpack.c.l.b16 %v383
    %v423 = vunpack.c.l.b16 %v384
    %v424 = vunpack.c.l.b16 %v385
    %v425 = vunpack.c.l.b16 %v386
    %v426 = vpack.c.b16 %v411, %v410
    %v427 = vpack.c.b16 %v413, %v412
    %v428 = vpack.c.b16 %v415, %v414
    %v429 = vpack.c.b16 %v417, %v416
    %v430 = vpack.c.b16 %v419, %v418
    %v431 = vpack.c.b16 %v421, %v420
    %v432 = vpack.c.b16 %v423, %v422
    %v433 = vpack.c.b16 %v425, %v424
    %442 = vmatprep.subr.bf16.mxu0 0
    %443 = vmatpush1.bf16.msra.mxu0 %v426
    %444 = vmatprep.subr.bf16.mxu0 0
    %445 = vmatpush1.bf16.msra.mxu0 %v427
    %446 = vmatprep.subr.bf16.mxu0 0
    %447 = vmatpush1.bf16.msra.mxu0 %v428
    %448 = vmatprep.subr.bf16.mxu0 0
    %449 = vmatpush1.bf16.msra.mxu0 %v429
    %450 = vmatprep.subr.bf16.mxu0 0
    %451 = vmatpush1.bf16.msra.mxu0 %v430
    %452 = vmatprep.subr.bf16.mxu0 0
    %453 = vmatpush1.bf16.msra.mxu0 %v431
    %454 = vmatprep.subr.bf16.mxu0 0
    %455 = vmatpush1.bf16.msra.mxu0 %v432
    %456 = vmatprep.subr.bf16.mxu0 0
    %457 = vmatpush1.bf16.msra.mxu0 %v433
    %458 = vmatprep.subr.bf16.mxu0 0
    %459 = vmatpush1.bf16.msra.mxu0 0
    %460 = vmatprep.subr.bf16.mxu0 0
    %461 = vmatpush1.bf16.msra.mxu0 0
    %462 = vmatprep.subr.bf16.mxu0 0
    %463 = vmatpush1.bf16.msra.mxu0 0
    %464 = vmatprep.subr.bf16.mxu0 0
    %465 = vmatpush1.bf16.msra.mxu0 0
    %466 = vmatprep.subr.bf16.mxu0 0
    %467 = vmatpush1.bf16.msra.mxu0 0
    %468 = vmatprep.subr.bf16.mxu0 0
    %469 = vmatpush1.bf16.msra.mxu0 0
    %470 = vmatprep.subr.bf16.mxu0 0
    %471 = vmatpush1.bf16.msra.mxu0 0
    %472 = vmatprep.subr.bf16.mxu0 0
    %473 = vmatpush1.bf16.msra.mxu0 0
    %474 = vmatprep.mubr.bf16.mxu0 0
    %475 = vmatmul.mubr.bf16.gmra.mrb[0].mxu0 %v363
    %v476 = vpop.f32.mrb[0].mxu0
    %v477 = vadd.f32 %v392, %v476
    %v478 = vpop.f32.mrb[0].mxu0
    %v479 = vpop.f32.mrb[0].mxu0
    %v480 = vadd.f32 %v392, %v479
    %v481 = vpop.f32.mrb[0].mxu0
    %482 = vmatprep.mubr.bf16.mxu0 0
    %483 = vmatmul.mubr.bf16.gmra.mrb[0].mxu0 %v364
    %v484 = vpop.f32.mrb[0].mxu0
    %v485 = vadd.f32 %v392, %v484
    %v486 = vpop.f32.mrb[0].mxu0
    %v487 = vpop.f32.mrb[0].mxu0
    %v488 = vadd.f32 %v392, %v487
    %v489 = vpop.f32.mrb[0].mxu0
    %490 = vmatprep.mubr.bf16.mxu0 0
    %491 = vmatmul.mubr.bf16.gmra.mrb[0].mxu0 %v365
    %v492 = vpop.f32.mrb[0].mxu0
    %v493 = vadd.f32 %v392, %v492
    %v494 = vpop.f32.mrb[0].mxu0
    %v495 = vpop.f32.mrb[0].mxu0
    %v496 = vadd.f32 %v392, %v495
    %v497 = vpop.f32.mrb[0].mxu0
    %498 = vmatprep.mubr.bf16.mxu0 0
    %499 = vmatmul.mubr.bf16.gmra.mrb[0].mxu0 %v366
    %v500 = vpop.f32.mrb[0].mxu0
    %v501 = vadd.f32 %v392, %v500
    %v502 = vpop.f32.mrb[0].mxu0
    %v503 = vpop.f32.mrb[0].mxu0
    %v504 = vadd.f32 %v392, %v503
    %v505 = vpop.f32.mrb[0].mxu0
    %506 = vmatprep.mubr.bf16.mxu0 0
    %507 = vmatmul.mubr.bf16.gmra.mrb[0].mxu0 %v367
    %v508 = vpop.f32.mrb[0].mxu0
    %v509 = vadd.f32 %v392, %v508
    %v510 = vpop.f32.mrb[0].mxu0
    %v511 = vpop.f32.mrb[0].mxu0
    %v512 = vadd.f32 %v392, %v511
    %v513 = vpop.f32.mrb[0].mxu0
    %514 = vmatprep.mubr.bf16.mxu0 0
    %515 = vmatmul.mubr.bf16.gmra.mrb[0].mxu0 %v368
    %v516 = vpop.f32.mrb[0].mxu0
    %v517 = vadd.f32 %v392, %v516
    %v518 = vpop.f32.mrb[0].mxu0
    %v519 = vpop.f32.mrb[0].mxu0
    %v520 = vadd.f32 %v392, %v519
    %v521 = vpop.f32.mrb[0].mxu0
    %522 = vmatprep.mubr.bf16.mxu0 0
    %523 = vmatmul.mubr.bf16.gmra.mrb[0].mxu0 %v369
    %v524 = vpop.f32.mrb[0].mxu0
    %v525 = vadd.f32 %v392, %v524
    %v526 = vpop.f32.mrb[0].mxu0
    %v527 = vpop.f32.mrb[0].mxu0
    %v528 = vadd.f32 %v392, %v527
    %v529 = vpop.f32.mrb[0].mxu0
    %530 = vmatprep.mubr.bf16.mxu0 0
    %531 = vmatmul.mubr.bf16.gmra.mrb[0].mxu0 %v370
    %v532 = vpop.f32.mrb[0].mxu0
    %v533 = vadd.f32 %v392, %v532
    %v534 = vpop.f32.mrb[0].mxu0
    %v535 = vpop.f32.mrb[0].mxu0
    %v536 = vadd.f32 %v392, %v535
    %v537 = vpop.f32.mrb[0].mxu0
    %538 = vdwg.mxu0
    %vm539 = vcmp.ge.f32.partialorder %v477, 0.0
    %vm540 = vcmp.ge.f32.partialorder %v480, 0.0
    %vm541 = vcmp.ge.f32.partialorder %v485, 0.0
    %vm542 = vcmp.ge.f32.partialorder %v488, 0.0
    %vm543 = vcmp.ge.f32.partialorder %v493, 0.0
    %vm544 = vcmp.ge.f32.partialorder %v496, 0.0
    %vm545 = vcmp.ge.f32.partialorder %v501, 0.0
    %vm546 = vcmp.ge.f32.partialorder %v504, 0.0
    %vm547 = vcmp.ge.f32.partialorder %v509, 0.0
    %vm548 = vcmp.ge.f32.partialorder %v512, 0.0
    %vm549 = vcmp.ge.f32.partialorder %v517, 0.0
    %vm550 = vcmp.ge.f32.partialorder %v520, 0.0
    %vm551 = vcmp.ge.f32.partialorder %v525, 0.0
    %vm552 = vcmp.ge.f32.partialorder %v528, 0.0
    %vm553 = vcmp.ge.f32.partialorder %v533, 0.0
    %vm554 = vcmp.ge.f32.partialorder %v536, 0.0
    %v555 = vmul.f32 %v477, 0.1
    %v556 = vmul.f32 %v480, 0.1
    %v557 = vmul.f32 %v485, 0.1
    %v558 = vmul.f32 %v488, 0.1
    %v559 = vmul.f32 %v493, 0.1
    %v560 = vmul.f32 %v496, 0.1
    %v561 = vmul.f32 %v501, 0.1
    %v562 = vmul.f32 %v504, 0.1
    %v563 = vmul.f32 %v509, 0.1
    %v564 = vmul.f32 %v512, 0.1
    %v565 = vmul.f32 %v517, 0.1
    %v566 = vmul.f32 %v520, 0.1
    %v567 = vmul.f32 %v525, 0.1
    %v568 = vmul.f32 %v528, 0.1
    %v569 = vmul.f32 %v533, 0.1
    %v570 = vmul.f32 %v536, 0.1
    %v571 = vsel %vm539, %v477, %v555
    %v572 = vsel %vm540, %v480, %v556
    %v573 = vsel %vm541, %v485, %v557
    %v574 = vsel %vm542, %v488, %v558
    %v575 = vsel %vm543, %v493, %v559
    %v576 = vsel %vm544, %v496, %v560
    %v577 = vsel %vm545, %v501, %v561
    %v578 = vsel %vm546, %v504, %v562
    %v579 = vsel %vm547, %v509, %v563
    %v580 = vsel %vm548, %v512, %v564
    %v581 = vsel %vm549, %v517, %v565
    %v582 = vsel %vm550, %v520, %v566
    %v583 = vsel %vm551, %v525, %v567
    %v584 = vsel %vm552, %v528, %v568
    %v585 = vsel %vm553, %v533, %v569
    %v586 = vsel %vm554, %v536, %v570
    %v587 = vpack.c.bf16 %v572, %v571
    %v588 = vpack.c.bf16 %v574, %v573
    %v589 = vpack.c.bf16 %v576, %v575
    %v590 = vpack.c.bf16 %v578, %v577
    %v591 = vpack.c.bf16 %v580, %v579
    %v592 = vpack.c.bf16 %v582, %v581
    %v593 = vpack.c.bf16 %v584, %v583
    %v594 = vpack.c.bf16 %v586, %v585
    %v595 = vld [vmem:[#allocation8] sm:$0xf]
    %v596 = vld [vmem:[#allocation8 + $0x4] sm:$0xf]
    %v597 = vld [vmem:[#allocation8 + $0x8] sm:$0xf]
    %v598 = vld [vmem:[#allocation8 + $0xc] sm:$0xf]
    %v599 = vld [vmem:[#allocation8 + $0x10] sm:$0xf]
    %v600 = vld [vmem:[#allocation8 + $0x14] sm:$0xf]
    %v601 = vld [vmem:[#allocation8 + $0x18] sm:$0xf]
    %v602 = vld [vmem:[#allocation8 + $0x1c] sm:$0xf]
    %v603 = vld [vmem:[#allocation8 + $0x20] sm:$0xf]
    %v604 = vld [vmem:[#allocation8 + $0x24] sm:$0xf]
    %v605 = vld [vmem:[#allocation8 + $0x28] sm:$0xf]
    %v606 = vld [vmem:[#allocation8 + $0x2c] sm:$0xf]
    %v607 = vld [vmem:[#allocation8 + $0x30] sm:$0xf]
    %v608 = vld [vmem:[#allocation8 + $0x34] sm:$0xf]
    %v609 = vld [vmem:[#allocation8 + $0x38] sm:$0xf]
    %v610 = vld [vmem:[#allocation8 + $0x3c] sm:$0xf]
    %v611 = vld [vmem:[%s6] sm:$0x1]
    %v613 = vlaneseq
    %v614 = vshrl.u32 %v613, 7
    %v615 = vsub.s32 0, %v614
    %v616 = vrot.slane %v611, %v615
    %v634 = vunpack.c.l.b16 %v595
    %v635 = vunpack.c.l.b16 %v596
    %v636 = vunpack.c.l.b16 %v597
    %v637 = vunpack.c.l.b16 %v598
    %v638 = vunpack.c.l.b16 %v599
    %v639 = vunpack.c.l.b16 %v600
    %v640 = vunpack.c.l.b16 %v601
    %v641 = vunpack.c.l.b16 %v602
    %v642 = vunpack.c.l.b16 %v603
    %v643 = vunpack.c.l.b16 %v604
    %v644 = vunpack.c.l.b16 %v605
    %v645 = vunpack.c.l.b16 %v606
    %v646 = vunpack.c.l.b16 %v607
    %v647 = vunpack.c.l.b16 %v608
    %v648 = vunpack.c.l.b16 %v609
    %v649 = vunpack.c.l.b16 %v610
    %v650 = vpack.c.b16 %v635, %v634
    %v651 = vpack.c.b16 %v637, %v636
    %v652 = vpack.c.b16 %v639, %v638
    %v653 = vpack.c.b16 %v641, %v640
    %v654 = vpack.c.b16 %v643, %v642
    %v655 = vpack.c.b16 %v645, %v644
    %v656 = vpack.c.b16 %v647, %v646
    %v657 = vpack.c.b16 %v649, %v648
    %666 = vmatprep.subr.bf16.mxu0 0
    %667 = vmatpush1.bf16.msra.mxu0 %v650
    %668 = vmatprep.subr.bf16.mxu0 0
    %669 = vmatpush1.bf16.msra.mxu0 %v651
    %670 = vmatprep.subr.bf16.mxu0 0
    %671 = vmatpush1.bf16.msra.mxu0 %v652
    %672 = vmatprep.subr.bf16.mxu0 0
    %673 = vmatpush1.bf16.msra.mxu0 %v653
    %674 = vmatprep.subr.bf16.mxu0 0
    %675 = vmatpush1.bf16.msra.mxu0 %v654
    %676 = vmatprep.subr.bf16.mxu0 0
    %677 = vmatpush1.bf16.msra.mxu0 %v655
    %678 = vmatprep.subr.bf16.mxu0 0
    %679 = vmatpush1.bf16.msra.mxu0 %v656
    %680 = vmatprep.subr.bf16.mxu0 0
    %681 = vmatpush1.bf16.msra.mxu0 %v657
    %682 = vmatprep.subr.bf16.mxu0 0
    %683 = vmatpush1.bf16.msra.mxu0 0
    %684 = vmatprep.subr.bf16.mxu0 0
    %685 = vmatpush1.bf16.msra.mxu0 0
    %686 = vmatprep.subr.bf16.mxu0 0
    %687 = vmatpush1.bf16.msra.mxu0 0
    %688 = vmatprep.subr.bf16.mxu0 0
    %689 = vmatpush1.bf16.msra.mxu0 0
    %690 = vmatprep.subr.bf16.mxu0 0
    %691 = vmatpush1.bf16.msra.mxu0 0
    %692 = vmatprep.subr.bf16.mxu0 0
    %693 = vmatpush1.bf16.msra.mxu0 0
    %694 = vmatprep.subr.bf16.mxu0 0
    %695 = vmatpush1.bf16.msra.mxu0 0
    %696 = vmatprep.subr.bf16.mxu0 0
    %697 = vmatpush1.bf16.msra.mxu0 0
    %698 = vmatprep.mubr.bf16.mxu0 0
    %699 = vmatmul.mubr.bf16.gmra.mrb[0].mxu0 %v587
    %v700 = vpop.f32.mrb[0].mxu0
    %v701 = vadd.f32 %v616, %v700
    %v702 = vpop.f32.mrb[0].mxu0
    %v703 = vpop.f32.mrb[0].mxu0
    %v704 = vadd.f32 %v616, %v703
    %v705 = vpop.f32.mrb[0].mxu0
    %706 = vmatprep.mubr.bf16.mxu0 0
    %707 = vmatmul.mubr.bf16.gmra.mrb[0].mxu0 %v588
    %v708 = vpop.f32.mrb[0].mxu0
    %v709 = vadd.f32 %v616, %v708
    %v710 = vpop.f32.mrb[0].mxu0
    %v711 = vpop.f32.mrb[0].mxu0
    %v712 = vadd.f32 %v616, %v711
    %v713 = vpop.f32.mrb[0].mxu0
    %714 = vmatprep.mubr.bf16.mxu0 0
    %715 = vmatmul.mubr.bf16.gmra.mrb[0].mxu0 %v589
    %v716 = vpop.f32.mrb[0].mxu0
    %v717 = vadd.f32 %v616, %v716
    %v718 = vpop.f32.mrb[0].mxu0
    %v719 = vpop.f32.mrb[0].mxu0
    %v720 = vadd.f32 %v616, %v719
    %v721 = vpop.f32.mrb[0].mxu0
    %722 = vmatprep.mubr.bf16.mxu0 0
    %723 = vmatmul.mubr.bf16.gmra.mrb[0].mxu0 %v590
    %v724 = vpop.f32.mrb[0].mxu0
    %v725 = vadd.f32 %v616, %v724
    %v726 = vpop.f32.mrb[0].mxu0
    %v727 = vpop.f32.mrb[0].mxu0
    %v728 = vadd.f32 %v616, %v727
    %v729 = vpop.f32.mrb[0].mxu0
    %730 = vmatprep.mubr.bf16.mxu0 0
    %731 = vmatmul.mubr.bf16.gmra.mrb[0].mxu0 %v591
    %v732 = vpop.f32.mrb[0].mxu0
    %v733 = vadd.f32 %v616, %v732
    %v734 = vpop.f32.mrb[0].mxu0
    %v735 = vpop.f32.mrb[0].mxu0
    %v736 = vadd.f32 %v616, %v735
    %v737 = vpop.f32.mrb[0].mxu0
    %738 = vmatprep.mubr.bf16.mxu0 0
    %739 = vmatmul.mubr.bf16.gmra.mrb[0].mxu0 %v592
    %v740 = vpop.f32.mrb[0].mxu0
    %v741 = vadd.f32 %v616, %v740
    %v742 = vpop.f32.mrb[0].mxu0
    %v743 = vpop.f32.mrb[0].mxu0
    %v744 = vadd.f32 %v616, %v743
    %v745 = vpop.f32.mrb[0].mxu0
    %746 = vmatprep.mubr.bf16.mxu0 0
    %747 = vmatmul.mubr.bf16.gmra.mrb[0].mxu0 %v593
    %v748 = vpop.f32.mrb[0].mxu0
    %v749 = vadd.f32 %v616, %v748
    %v750 = vpop.f32.mrb[0].mxu0
    %v751 = vpop.f32.mrb[0].mxu0
    %v752 = vadd.f32 %v616, %v751
    %v753 = vpop.f32.mrb[0].mxu0
    %754 = vmatprep.mubr.bf16.mxu0 0
    %755 = vmatmul.mubr.bf16.gmra.mrb[0].mxu0 %v594
    %v756 = vpop.f32.mrb[0].mxu0
    %v757 = vadd.f32 %v616, %v756
    %v758 = vpop.f32.mrb[0].mxu0
    %v759 = vpop.f32.mrb[0].mxu0
    %v760 = vadd.f32 %v616, %v759
    %v761 = vpop.f32.mrb[0].mxu0
    %762 = vdwg.mxu0
    %763 = vst [vmem:[#allocation10] sm:$0xff] %v701
    %764 = vst [vmem:[#allocation10 + $0x8] sm:$0xff] %v704
    %765 = vst [vmem:[#allocation10 + $0x10] sm:$0xff] %v709
    %766 = vst [vmem:[#allocation10 + $0x18] sm:$0xff] %v712
    %767 = vst [vmem:[#allocation10 + $0x20] sm:$0xff] %v717
    %768 = vst [vmem:[#allocation10 + $0x28] sm:$0xff] %v720
    %769 = vst [vmem:[#allocation10 + $0x30] sm:$0xff] %v725
    %770 = vst [vmem:[#allocation10 + $0x38] sm:$0xff] %v728
    %771 = vst [vmem:[#allocation10 + $0x40] sm:$0xff] %v733
    %772 = vst [vmem:[#allocation10 + $0x48] sm:$0xff] %v736
    %773 = vst [vmem:[#allocation10 + $0x50] sm:$0xff] %v741
    %774 = vst [vmem:[#allocation10 + $0x58] sm:$0xff] %v744
    %775 = vst [vmem:[#allocation10 + $0x60] sm:$0xff] %v749
    %776 = vst [vmem:[#allocation10 + $0x68] sm:$0xff] %v752
    %777 = vst [vmem:[#allocation10 + $0x70] sm:$0xff] %v757
    %778 = vst [vmem:[#allocation10 + $0x78] sm:$0xff] %v760
    // Predicated region
    $region46: #{tpu_custom_call.1} parent=1 // pred_check
      _
    $region47: #{tpu_custom_call.1} parent=1 // pred_check_branch
      %780 = sbr.rel (0) target = $region49
    $region48: #{tpu_custom_call.1} parent=1 // pred_region
      %s782 = ssub.s32 2048, 2048
      %783 = vsyncadd [#allocation4], %s782
      %s784 = sshll.u32 [#allocation10], 4
      %s785 = int_to_ptr.vmem [resolvable:$true] %s784
      %790 = dma.vmem_to_hbm [thread:$0]  %s785, 2048, %s7, [#allocation4], 128, 128, 8
    $region49: #{tpu_custom_call.1} parent=1 // pred_fallthru
      _
    // Predicated region
    $region50: #{tpu_custom_call.1} parent=1 // pred_check
      _
    $region51: #{tpu_custom_call.1} parent=1 // pred_check_branch
      %792 = sbr.rel (0) target = $region53
    $region52: #{tpu_custom_call.1} parent=1 // pred_region
      %793 = dma.done [#allocation4], 2048
    $region53: #{tpu_custom_call.1} parent=1 // pred_fallthru
      _
    %794 = vsyncpa [#allocation3], 1
    %795 = vsyncpa [#allocation6], 1
    %796 = vsyncpa [#allocation9], 1
    %797 = vsyncpa [#allocation4], 1

</llo_original>
